<compile_context>
chip_gen: v7x
topology: tpu7x:2x2x1
jax: 0.10.0
libtpu: 0.0.40
codegen_flags: <defaults>
</compile_context>

<pallas_src>
import math

import jax
import jax.numpy as jnp
from jax.experimental import pallas as pl
from jax.experimental.pallas import tpu as pltpu

_EPS = 1e-5
_VMEM_LIMIT_BYTES = 32 * 1024 * 1024       # explicit scoped-VMEM limit (all gens)
_TARGET_TILE_F32_BYTES = 2 * 1024 * 1024   # ~2 MiB of f32 per tile buffer
_MAX_TILE_ROWS = 4096


def _cdiv(a, b):
    return -(-a // b)


def _round_up(a, m):
    return _cdiv(a, m) * m


def _num_tensorcores():
    """Best-effort count of TensorCores one Pallas call's grid is sharded over."""
    try:
        kind = str(getattr(jax.devices()[0], "device_kind", "")).lower()
    except Exception:
        return 1
    # v4 / v5p (megacore) and v7x shard a 'parallel' grid axis across 2 TCs;
    # v2/v3/v5e/v6e are single-TC for this purpose.
    if "v4" in kind or "v5p" in kind or "7" in kind:
        return 2
    return 1


# ----------------------------------------------------------------------------
# Kernels
# ----------------------------------------------------------------------------
def _ln_lane_kernel(x_ref, w_ref, b_ref, o_ref):
    """LayerNorm when C >= 128 (or C not lane-packable): reduce along lanes."""
    x = x_ref[...].astype(jnp.float32)
    mu = jnp.mean(x, axis=-1, keepdims=True)
    xc = x - mu
    var = jnp.mean(xc * xc, axis=-1, keepdims=True)   # population variance
    inv = jax.lax.rsqrt(var + _EPS)
    w = w_ref[...].astype(jnp.float32)
    b = b_ref[...].astype(jnp.float32)
    o_ref[...] = (xc * inv * w + b).astype(o_ref.dtype)
    # NOTE: for very wide C the cross-lane means run on the XLU; swap to a
    # ones-vector MXU matmul only if profiling ever shows XLU-bound.


def _split3_bf16(v):
    """Split f32 `v` into three bf16 pieces with v ~= hi + mid + lo (~24 bits)."""
    hi = v.astype(jnp.bfloat16)
    r = v - hi.astype(jnp.float32)
    mid = r.astype(jnp.bfloat16)
    lo = (r - mid.astype(jnp.float32)).astype(jnp.bfloat16)
    return hi, mid, lo


def _seg_mean(v, m):
    """Per-segment mean of f32 v:(tr, W), broadcast back across each segment.

    m is a bf16 (W, W) block-diagonal averaging matrix (1/C inside each C-wide
    segment; 1/C is exact in bf16 for power-of-two C).  v is split into three
    bf16 pieces, each pushed through one single-pass bf16 MXU matmul with f32
    accumulation: a hand-rolled bf16x3 — half the MXU passes of the previous
    Precision.HIGHEST, ~f32 accuracy, no exotic precision flags needed.
    """
    hi, mid, lo = _split3_bf16(v)
    acc = jnp.dot(hi, m, preferred_element_type=jnp.float32)
    acc = acc + jnp.dot(mid, m, preferred_element_type=jnp.float32)
    acc = acc + jnp.dot(lo, m, preferred_element_type=jnp.float32)
    return acc


def _ln_packed_kernel(x_ref, w_ref, b_ref, m_ref, o_ref):
    """LayerNorm for small C: each 128-lane row packs G = 128//C input rows."""
    x = x_ref[...].astype(jnp.float32)
    m = m_ref[...]                                     # bf16 averaging matrix
    mu = _seg_mean(x, m)
    xc = x - mu
    var = _seg_mean(xc * xc, m)                        # two-pass (centered) variance
    # rsqrt over the full (tr, W) tile is Gx-redundant per segment but stays
    # lane-dense; narrowing it only matters if the single EUP slot saturates
    # (possible on v5e only — not observed).
    inv = jax.lax.rsqrt(var + _EPS)
    w = w_ref[...].astype(jnp.float32)
    b = b_ref[...].astype(jnp.float32)
    o_ref[...] = (xc * inv * w + b).astype(o_ref.dtype)


# ----------------------------------------------------------------------------
# Tiling
# ----------------------------------------------------------------------------
def _choose_tiling(R, W, itemsize, num_cores):
    """Rows-per-tile and grid size for an (R, W) lane-reduced slab.

    - tile sized to ~_TARGET_TILE_F32_BYTES of f32 work
    - rows rounded to the dtype's sublane tile (8 f32 / 16 bf16 / 32 int8)
    - on multi-TC chips, prefer an even block count with >= 2 blocks per core
      (balance + pipelining); single-TC chips never get a forced extra step.
    """
    sub = max(8, 32 // max(1, itemsize))
    tr = _TARGET_TILE_F32_BYTES // (W * 4)
    tr = max(sub, (min(tr, _MAX_TILE_ROWS) // sub) * sub)
    nb = 1 if tr >= R else _cdiv(R, tr)
    if num_cores > 1:
        min_blocks = 2 * num_cores
        enough_work = R * W * 4 >= 256 * 1024
        if nb < min_blocks and enough_work and R >= min_blocks * sub:
            nb = min_blocks
        elif nb > 1 and nb % num_cores:
            nb += num_cores - (nb % num_cores)
    if nb <= 1:
        return R, 1           # single block spanning the full row dim (always legal)
    tr = max(sub, _round_up(_cdiv(R, nb), sub))
    if tr >= R:
        return R, 1
    return tr, _cdiv(R, tr)


# ----------------------------------------------------------------------------
# Wrapper
# ----------------------------------------------------------------------------
def with_bias_layernorm(x, weight, bias):
    """LayerNorm over the last dim with affine (weight, bias), eps=1e-5."""
    orig_shape = x.shape
    C = orig_shape[-1]
    rows = int(math.prod(orig_shape[:-1])) if len(orig_shape) > 1 else 1
    x2 = x.reshape(rows, C)
    w1 = weight.reshape(-1)
    b1 = bias.reshape(-1)

    itemsize = jnp.dtype(x.dtype).itemsize
    num_cores = _num_tensorcores()
    cparams = pltpu.CompilerParams(
        dimension_semantics=("parallel",),
        vmem_limit_bytes=_VMEM_LIMIT_BYTES,
    )

    # Lane-dense packing factor: fold G rows into the 128-lane axis when C<128.
    # C<128 with 128 % C != 0 (e.g. 80, 96) still takes the G=1 path; the
    # model's channel counts are powers of two so the lcm generalization is
    # left out.
    if C < 128 and 128 % C == 0:
        G = 128 // C
    else:
        G = 1

    if G > 1:
        W = G * C
        rem = rows % G
        rows_g = rows + ((G - rem) if rem else 0)
        if rows_g != rows:
            # Tiny (< G rows) alignment pad; the common aligned case is copy-free.
            x2 = jnp.pad(x2, ((0, rows_g - rows), (0, 0)))
        Rp = rows_g // G
        xp = x2.reshape(Rp, W)                     # contiguous reshape: no copy
        wp = jnp.tile(w1, G).reshape(1, W)
        bp = jnp.tile(b1, G).reshape(1, W)
        lane = jnp.arange(W)
        seg = lane // C
        m = jnp.where(seg[:, None] == seg[None, :], 1.0 / C, 0.0).astype(jnp.bfloat16)

        tr, nb = _choose_tiling(Rp, W, itemsize, num_cores)
        cost = pl.CostEstimate(
            flops=int(6 * 2 * Rp * W * W + 10 * Rp * W),   # 6 single bf16 MXU passes
            transcendentals=int(Rp * W),                   # rsqrt over full width
            bytes_accessed=int(2 * Rp * W * itemsize),
        )
        out = pl.pallas_call(
            _ln_packed_kernel,
            out_shape=jax.ShapeDtypeStruct((Rp, W), x.dtype),
            grid_spec=pltpu.PrefetchScalarGridSpec(
                num_scalar_prefetch=0,
                grid=(nb,),
                in_specs=[
                    pl.BlockSpec((tr, W), lambda i: (i, 0)),
                    pl.BlockSpec((1, W), lambda i: (0, 0)),
                    pl.BlockSpec((1, W), lambda i: (0, 0)),
                    pl.BlockSpec((W, W), lambda i: (0, 0)),
                ],
                out_specs=pl.BlockSpec((tr, W), lambda i: (i, 0)),
            ),
            compiler_params=cparams,
            cost_estimate=cost,
        )(xp, wp, bp, m)
        out2 = out.reshape(rows_g, C)
        if rows_g != rows:
            out2 = out2[:rows]
    else:
        tr, nb = _choose_tiling(rows, C, itemsize, num_cores)
        cost = pl.CostEstimate(
            flops=int(8 * rows * C),
            transcendentals=int(rows),
            bytes_accessed=int(2 * rows * C * itemsize),
        )
        out2 = pl.pallas_call(
            _ln_lane_kernel,
            out_shape=jax.ShapeDtypeStruct((rows, C), x.dtype),
            grid_spec=pltpu.PrefetchScalarGridSpec(
                num_scalar_prefetch=0,
                grid=(nb,),
                in_specs=[
                    pl.BlockSpec((tr, C), lambda i: (i, 0)),
                    pl.BlockSpec((1, C), lambda i: (0, 0)),
                    pl.BlockSpec((1, C), lambda i: (0, 0)),
                ],
                out_specs=pl.BlockSpec((tr, C), lambda i: (i, 0)),
            ),
            compiler_params=cparams,
            cost_estimate=cost,
        )(x2, w1.reshape(1, C), b1.reshape(1, C))

    return out2.reshape(orig_shape)


# ----------------------------------------------------------------------------
# Reference + self-test
# ----------------------------------------------------------------------------
def _reference_layernorm(x, weight, bias):
    x32 = x.astype(jnp.float32)
    mu = jnp.mean(x32, axis=-1, keepdims=True)
    var = jnp.mean((x32 - mu) ** 2, axis=-1, keepdims=True)
    return ((x32 - mu) / jnp.sqrt(var + _EPS) * weight + bias).astype(x.dtype)


if __name__ == "__main__":
    key = jax.random.PRNGKey(0)
    k1, k2, k3 = jax.random.split(key, 3)

    # Primary: (B, N, C) token layout from to_3d(x); C=32 exercises the
    # lane-packed MXU segment-reduce path, single block, no padding/slicing.
    B, N, C = 2, 64, 32
    x = jax.random.normal(k1, (B, N, C), dtype=jnp.float32)
    weight = jnp.ones((C,), dtype=jnp.float32)   # nn.Parameter(torch.ones)
    bias = jnp.zeros((C,), dtype=jnp.float32)    # nn.Parameter(torch.zeros)

    out = jax.block_until_ready(with_bias_layernorm(x, weight, bias))
    ref = _reference_layernorm(x, weight, bias)
    assert out.shape == x.shape
    assert float(jnp.max(jnp.abs(out - ref))) < 1e-5

    # Secondary: C=128 exercises the lane-reduction path + nontrivial affine.
    x3 = jax.random.normal(k2, (2, 16, 128), dtype=jnp.float32)
    w3 = jax.random.normal(k3, (128,), dtype=jnp.float32)
    b3 = jnp.linspace(-1.0, 1.0, 128, dtype=jnp.float32)
    out3 = jax.block_until_ready(with_bias_layernorm(x3, w3, b3))
    ref3 = _reference_layernorm(x3, w3, b3)
    assert float(jnp.max(jnp.abs(out3 - ref3))) < 1e-4

    # Tertiary: rows not a multiple of G exercises the small G-alignment pad.
    x4 = jax.random.normal(k1, (3, 5, 32), dtype=jnp.float32)
    out4 = jax.block_until_ready(with_bias_layernorm(x4, weight, bias))
    ref4 = _reference_layernorm(x4, weight, bias)
    assert out4.shape == x4.shape
    assert float(jnp.max(jnp.abs(out4 - ref4))) < 1e-5

    # Quaternary: large-enough row count to force a multi-block grid with a
    # partial (overrunning) final block plus the G-remainder pad path.
    x5 = jax.random.normal(k2, (2, 8195, 32), dtype=jnp.float32)
    out5 = jax.block_until_ready(with_bias_layernorm(x5, weight, bias))
    ref5 = _reference_layernorm(x5, weight, bias)
    assert out5.shape == x5.shape
    assert float(jnp.max(jnp.abs(out5 - ref5))) < 1e-5

    print("KERNEL_OK")
</pallas_src>

<mosaic_0001>
module attributes {stable_mosaic.version = 11 : i64} {
  func.func @_ln_packed_kernel(%arg0: i32, %arg1: memref<32x128xf32, #tpu.memory_space<vmem>>, %arg2: memref<1x128xf32, #tpu.memory_space<vmem>>, %arg3: memref<1x128xf32, #tpu.memory_space<vmem>>, %arg4: memref<128x128xbf16, #tpu.memory_space<vmem>>, %arg5: memref<32x128xf32, #tpu.memory_space<vmem>>) attributes {dimension_semantics = [#tpu.dimension_semantics<parallel>], iteration_bounds = array<i64: 1>, scalar_prefetch = 0 : i64, scratch_operands = 0 : i64, tpu.core_type = #tpu.core_type<tc>, window_params = [{transform_indices = @transform_0, window_bounds = array<i64: 32, 128>}, {pipeline_mode = #tpu.pipeline_mode<synchronous>, transform_indices = @transform_1, window_bounds = array<i64: 1, 128>}, {pipeline_mode = #tpu.pipeline_mode<synchronous>, transform_indices = @transform_2, window_bounds = array<i64: 1, 128>}, {pipeline_mode = #tpu.pipeline_mode<synchronous>, transform_indices = @transform_3, window_bounds = array<i64: 128, 128>}, {transform_indices = @transform_4, window_bounds = array<i64: 32, 128>}]} {
    %c0 = arith.constant 0 : index
    %c0_0 = arith.constant 0 : index
    %0 = vector.load %arg1[%c0, %c0_0] : memref<32x128xf32, #tpu.memory_space<vmem>>, vector<32x128xf32>
    %c0_1 = arith.constant 0 : index
    %c0_2 = arith.constant 0 : index
    %1 = vector.load %arg4[%c0_1, %c0_2] : memref<128x128xbf16, #tpu.memory_space<vmem>>, vector<128x128xbf16>
    %2 = arith.truncf %0 : vector<32x128xf32> to vector<32x128xbf16>
    %3 = arith.extf %2 : vector<32x128xbf16> to vector<32x128xf32>
    %4 = arith.subf %0, %3 : vector<32x128xf32>
    %5 = arith.truncf %4 : vector<32x128xf32> to vector<32x128xbf16>
    %6 = arith.extf %5 : vector<32x128xbf16> to vector<32x128xf32>
    %7 = arith.subf %4, %6 : vector<32x128xf32>
    %8 = arith.truncf %7 : vector<32x128xf32> to vector<32x128xbf16>
    %cst = arith.constant dense<0.000000e+00> : vector<32x128xf32>
    %9 = tpu.matmul %2, %1, %cst {dimension_numbers = #tpu.dot_dimension_numbers<[1], [0], [0], [1], [0, 0, 1, 1], [], []>} : vector<32x128xbf16>, vector<128x128xbf16>, vector<32x128xf32> -> vector<32x128xf32>
    %cst_3 = arith.constant dense<0.000000e+00> : vector<32x128xf32>
    %10 = tpu.matmul %5, %1, %cst_3 {dimension_numbers = #tpu.dot_dimension_numbers<[1], [0], [0], [1], [0, 0, 1, 1], [], []>} : vector<32x128xbf16>, vector<128x128xbf16>, vector<32x128xf32> -> vector<32x128xf32>
    %11 = arith.addf %9, %10 : vector<32x128xf32>
    %cst_4 = arith.constant dense<0.000000e+00> : vector<32x128xf32>
    %12 = tpu.matmul %8, %1, %cst_4 {dimension_numbers = #tpu.dot_dimension_numbers<[1], [0], [0], [1], [0, 0, 1, 1], [], []>} : vector<32x128xbf16>, vector<128x128xbf16>, vector<32x128xf32> -> vector<32x128xf32>
    %13 = arith.addf %11, %12 : vector<32x128xf32>
    %14 = arith.subf %0, %13 : vector<32x128xf32>
    %15 = arith.mulf %14, %14 : vector<32x128xf32>
    %16 = arith.truncf %15 : vector<32x128xf32> to vector<32x128xbf16>
    %17 = arith.extf %16 : vector<32x128xbf16> to vector<32x128xf32>
    %18 = arith.subf %15, %17 : vector<32x128xf32>
    %19 = arith.truncf %18 : vector<32x128xf32> to vector<32x128xbf16>
    %20 = arith.extf %19 : vector<32x128xbf16> to vector<32x128xf32>
    %21 = arith.subf %18, %20 : vector<32x128xf32>
    %22 = arith.truncf %21 : vector<32x128xf32> to vector<32x128xbf16>
    %cst_5 = arith.constant dense<0.000000e+00> : vector<32x128xf32>
    %23 = tpu.matmul %16, %1, %cst_5 {dimension_numbers = #tpu.dot_dimension_numbers<[1], [0], [0], [1], [0, 0, 1, 1], [], []>} : vector<32x128xbf16>, vector<128x128xbf16>, vector<32x128xf32> -> vector<32x128xf32>
    %cst_6 = arith.constant dense<0.000000e+00> : vector<32x128xf32>
    %24 = tpu.matmul %19, %1, %cst_6 {dimension_numbers = #tpu.dot_dimension_numbers<[1], [0], [0], [1], [0, 0, 1, 1], [], []>} : vector<32x128xbf16>, vector<128x128xbf16>, vector<32x128xf32> -> vector<32x128xf32>
    %25 = arith.addf %23, %24 : vector<32x128xf32>
    %cst_7 = arith.constant dense<0.000000e+00> : vector<32x128xf32>
    %26 = tpu.matmul %22, %1, %cst_7 {dimension_numbers = #tpu.dot_dimension_numbers<[1], [0], [0], [1], [0, 0, 1, 1], [], []>} : vector<32x128xbf16>, vector<128x128xbf16>, vector<32x128xf32> -> vector<32x128xf32>
    %27 = arith.addf %25, %26 : vector<32x128xf32>
    %cst_8 = arith.constant 9.99999974E-6 : f32
    %28 = vector.broadcast %cst_8 : f32 to vector<32x128xf32>
    %29 = arith.addf %27, %28 : vector<32x128xf32>
    %30 = math.rsqrt %29 : vector<32x128xf32>
    %c0_9 = arith.constant 0 : index
    %c0_10 = arith.constant 0 : index
    %31 = vector.load %arg2[%c0_9, %c0_10] : memref<1x128xf32, #tpu.memory_space<vmem>>, vector<1x128xf32>
    %c0_11 = arith.constant 0 : index
    %c0_12 = arith.constant 0 : index
    %32 = vector.load %arg3[%c0_11, %c0_12] : memref<1x128xf32, #tpu.memory_space<vmem>>, vector<1x128xf32>
    %33 = arith.mulf %14, %30 : vector<32x128xf32>
    %34 = vector.broadcast %31 : vector<1x128xf32> to vector<32x128xf32>
    %35 = arith.mulf %33, %34 : vector<32x128xf32>
    %36 = vector.broadcast %32 : vector<1x128xf32> to vector<32x128xf32>
    %37 = arith.addf %35, %36 : vector<32x128xf32>
    %c0_13 = arith.constant 0 : index
    %c0_14 = arith.constant 0 : index
    %38 = vector.load %arg5[%c0_13, %c0_14] : memref<32x128xf32, #tpu.memory_space<vmem>>, vector<32x128xf32>
    tpu.vector_store %arg5[%c0_13, %c0_14], %37 {strides = array<i32>} : memref<32x128xf32, #tpu.memory_space<vmem>>, vector<32x128xf32>,
    return
  }
  func.func @transform_0(%arg0: i32) -> (i32, i32) {
    %c0_i32 = arith.constant 0 : i32
    %c0_i32_0 = arith.constant 0 : i32
    return %arg0, %c0_i32 : i32, i32
  }
  func.func @transform_1(%arg0: i32) -> (i32, i32) {
    %c0_i32 = arith.constant 0 : i32
    %c0_i32_0 = arith.constant 0 : i32
    %c0_i32_1 = arith.constant 0 : i32
    return %c0_i32, %c0_i32_0 : i32, i32
  }
  func.func @transform_2(%arg0: i32) -> (i32, i32) {
    %c0_i32 = arith.constant 0 : i32
    %c0_i32_0 = arith.constant 0 : i32
    %c0_i32_1 = arith.constant 0 : i32
    return %c0_i32, %c0_i32_0 : i32, i32
  }
  func.func @transform_3(%arg0: i32) -> (i32, i32) {
    %c0_i32 = arith.constant 0 : i32
    %c0_i32_0 = arith.constant 0 : i32
    %c0_i32_1 = arith.constant 0 : i32
    return %c0_i32, %c0_i32_0 : i32, i32
  }
  func.func @transform_4(%arg0: i32) -> (i32, i32) {
    %c0_i32 = arith.constant 0 : i32
    %c0_i32_0 = arith.constant 0 : i32
    return %arg0, %c0_i32 : i32, i32
  }
}

</mosaic_0001>

<llo_original>
// kernel: tpu_custom_call.1
$region0: #{tpu_custom_call.1}
  #allocation0 [shape = 'u32[]', space=smem, size = 0x4, offset = 0x4, fixed_abs, tag = 'smem constant byte address 0x4 - core index']
  #allocation1 [shape = 'u32[144,128]{1,0:T(1,128)}', space=vmem, size = 0x12000, scoped, tag = 'internal scratch']
  %s0 = inlined_call_operand.hbm [shape: f32[32,128], index: 0, kind: input, shape index: {}]
  %s1 = inlined_call_operand.vmem [shape: f32[1,128], index: 1, kind: input, shape index: {}]
  %s2 = inlined_call_operand.vmem [shape: f32[1,128], index: 2, kind: input, shape index: {}]
  %s3 = inlined_call_operand.hbm [shape: bf16[128,128], index: 3, kind: input, shape index: {}]
  %s4 = inlined_call_operand.hbm [shape: f32[32,128], index: 4, kind: output, shape index: {}]
  %s5 = sld [smem:[#allocation0]]
  $region34: #{tpu_custom_call.1} parent=0
    _
  %s7 = ssub.s32 1, %s5
  %s8 = scalar_select 0, %s7, %s5
  $region1: #{tpu_custom_call.1} parent=0
    #allocation2 [shape = 'u8[16384]{0}', space=vmem, size = 0x4000, scoped, tag = 'input window, operand 0, single buffered']
    #allocation3 [shape = 's32[1]{0}', space=sflag, size = 0x4, scoped, tag = 'scoped memory for tpu_custom_call.1']
    #allocation4 [shape = 's32[1]{0}', space=sflag, size = 0x4, scoped, tag = 'scoped memory for tpu_custom_call.1']
    #allocation5 [shape = 'u8[32768]{0}', space=vmem, size = 0x8000, scoped, tag = 'input window, operand 3, single buffered']
    #allocation6 [shape = 's32[1]{0}', space=sflag, size = 0x4, scoped, tag = 'scoped memory for tpu_custom_call.1']
    #allocation7 [shape = 'u8[16384]{0}', space=vmem, size = 0x4000, scoped, tag = 'output window, operand 0, single buffered']
    %9 = vsyncpa [#allocation3], 0
    %10 = vsyncpa [#allocation6], 0
    %11 = vsyncpa [#allocation4], 0
    // Predicated region
    $region2: #{tpu_custom_call.1} parent=1 // pred_check
      _
    $region3: #{tpu_custom_call.1} parent=1 // pred_check_branch
      %13 = sbr.rel (0) target = $region5
    $region4: #{tpu_custom_call.1} parent=1 // pred_region
      %s15 = ssub.s32 512, 512
      %16 = vsyncadd [#allocation3], %s15
      %s17 = sshll.u32 [#allocation2], 4
      %s18 = int_to_ptr.vmem [resolvable:$true] %s17
      %23 = dma.hbm_to_vmem [thread:$0]  %s0, 512, %s18, [#allocation3], 128, 128, 8
    $region5: #{tpu_custom_call.1} parent=1 // pred_fallthru
      _
    // Predicated region
    $region6: #{tpu_custom_call.1} parent=1 // pred_check
      _
    $region7: #{tpu_custom_call.1} parent=1 // pred_check_branch
      %25 = sbr.rel (0) target = $region9
    $region8: #{tpu_custom_call.1} parent=1 // pred_region
      _
    $region9: #{tpu_custom_call.1} parent=1 // pred_fallthru
      _
    // Predicated region
    $region10: #{tpu_custom_call.1} parent=1 // pred_check
      _
    $region11: #{tpu_custom_call.1} parent=1 // pred_check_branch
      %27 = sbr.rel (0) target = $region13
    $region12: #{tpu_custom_call.1} parent=1 // pred_region
      _
    $region13: #{tpu_custom_call.1} parent=1 // pred_fallthru
      _
    // Predicated region
    $region14: #{tpu_custom_call.1} parent=1 // pred_check
      _
    $region15: #{tpu_custom_call.1} parent=1 // pred_check_branch
      %29 = sbr.rel (0) target = $region17
    $region16: #{tpu_custom_call.1} parent=1 // pred_region
      %s31 = ssub.s32 1024, 1024
      %32 = vsyncadd [#allocation6], %s31
      %s33 = sshll.u32 [#allocation5], 4
      %s34 = int_to_ptr.vmem [resolvable:$true] %s33
      %39 = dma.hbm_to_vmem [thread:$0]  %s3, 1024, %s34, [#allocation6], 64, 64, 4
    $region17: #{tpu_custom_call.1} parent=1 // pred_fallthru
      _
    // Predicated region
    $region18: #{tpu_custom_call.1} parent=1 // pred_check
      _
    $region19: #{tpu_custom_call.1} parent=1 // pred_check_branch
      %41 = sbr.rel (0) target = $region21
    $region20: #{tpu_custom_call.1} parent=1 // pred_region
      %42 = dma.done [#allocation3], 512
    $region21: #{tpu_custom_call.1} parent=1 // pred_fallthru
      _
    // Predicated region
    $region22: #{tpu_custom_call.1} parent=1 // pred_check
      _
    $region23: #{tpu_custom_call.1} parent=1 // pred_check_branch
      %44 = sbr.rel (0) target = $region25
    $region24: #{tpu_custom_call.1} parent=1 // pred_region
      %45 = dma.done [#allocation6], 1024
    $region25: #{tpu_custom_call.1} parent=1 // pred_fallthru
      _
    %v47 = vld [vmem:[#allocation2] sm:$0xff]
    %v48 = vld [vmem:[#allocation2 + $0x8] sm:$0xff]
    %v49 = vld [vmem:[#allocation2 + $0x10] sm:$0xff]
    %v50 = vld [vmem:[#allocation2 + $0x18] sm:$0xff]
    %v51 = vld [vmem:[#allocation5] sm:$0xf]
    %v52 = vld [vmem:[#allocation5 + $0x4] sm:$0xf]
    %v53 = vld [vmem:[#allocation5 + $0x8] sm:$0xf]
    %v54 = vld [vmem:[#allocation5 + $0xc] sm:$0xf]
    %v55 = vld [vmem:[#allocation5 + $0x10] sm:$0xf]
    %v56 = vld [vmem:[#allocation5 + $0x14] sm:$0xf]
    %v57 = vld [vmem:[#allocation5 + $0x18] sm:$0xf]
    %v58 = vld [vmem:[#allocation5 + $0x1c] sm:$0xf]
    %v59 = vld [vmem:[#allocation5 + $0x20] sm:$0xf]
    %v60 = vld [vmem:[#allocation5 + $0x24] sm:$0xf]
    %v61 = vld [vmem:[#allocation5 + $0x28] sm:$0xf]
    %v62 = vld [vmem:[#allocation5 + $0x2c] sm:$0xf]
    %v63 = vld [vmem:[#allocation5 + $0x30] sm:$0xf]
    %v64 = vld [vmem:[#allocation5 + $0x34] sm:$0xf]
    %v65 = vld [vmem:[#allocation5 + $0x38] sm:$0xf]
    %v66 = vld [vmem:[#allocation5 + $0x3c] sm:$0xf]
    %v67 = vpack.c.bf16 %v48, %v47
    %v68 = vpack.c.bf16 %v50, %v49
    %v69 = vunpack.c.l.bf16 %v67
    %v70 = vunpack.c.h.bf16 %v67
    %v71 = vunpack.c.l.bf16 %v68
    %v72 = vunpack.c.h.bf16 %v68
    %v73 = vsub.f32 %v47, %v69
    %v74 = vsub.f32 %v48, %v70
    %v75 = vsub.f32 %v49, %v71
    %v76 = vsub.f32 %v50, %v72
    %v77 = vpack.c.bf16 %v74, %v73
    %v78 = vpack.c.bf16 %v76, %v75
    %v79 = vunpack.c.l.bf16 %v77
    %v80 = vunpack.c.h.bf16 %v77
    %v81 = vunpack.c.l.bf16 %v78
    %v82 = vunpack.c.h.bf16 %v78
    %v83 = vsub.f32 %v73, %v79
    %v84 = vsub.f32 %v74, %v80
    %v85 = vsub.f32 %v75, %v81
    %v86 = vsub.f32 %v76, %v82
    %v87 = vpack.c.bf16 %v84, %v83
    %v88 = vpack.c.bf16 %v86, %v85
    %v105 = vunpack.c.l.b16 %v51
    %v106 = vunpack.c.l.b16 %v52
    %v107 = vunpack.c.l.b16 %v53
    %v108 = vunpack.c.l.b16 %v54
    %v109 = vunpack.c.l.b16 %v55
    %v110 = vunpack.c.l.b16 %v56
    %v111 = vunpack.c.l.b16 %v57
    %v112 = vunpack.c.l.b16 %v58
    %v113 = vunpack.c.l.b16 %v59
    %v114 = vunpack.c.l.b16 %v60
    %v115 = vunpack.c.l.b16 %v61
    %v116 = vunpack.c.l.b16 %v62
    %v117 = vunpack.c.l.b16 %v63
    %v118 = vunpack.c.l.b16 %v64
    %v119 = vunpack.c.l.b16 %v65
    %v120 = vunpack.c.l.b16 %v66
    %v121 = vpack.c.b16 %v106, %v105
    %v122 = vpack.c.b16 %v108, %v107
    %v123 = vpack.c.b16 %v110, %v109
    %v124 = vpack.c.b16 %v112, %v111
    %v125 = vpack.c.b16 %v114, %v113
    %v126 = vpack.c.b16 %v116, %v115
    %v127 = vpack.c.b16 %v118, %v117
    %v128 = vpack.c.b16 %v120, %v119
    %137 = vmatprep.subr.bf16.mxu0 0
    %138 = vmatpush1.bf16.msra.mxu0 %v121
    %139 = vmatprep.subr.bf16.mxu0 0
    %140 = vmatpush1.bf16.msra.mxu0 %v122
    %141 = vmatprep.subr.bf16.mxu0 0
    %142 = vmatpush1.bf16.msra.mxu0 %v123
    %143 = vmatprep.subr.bf16.mxu0 0
    %144 = vmatpush1.bf16.msra.mxu0 %v124
    %145 = vmatprep.subr.bf16.mxu0 0
    %146 = vmatpush1.bf16.msra.mxu0 %v125
    %147 = vmatprep.subr.bf16.mxu0 0
    %148 = vmatpush1.bf16.msra.mxu0 %v126
    %149 = vmatprep.subr.bf16.mxu0 0
    %150 = vmatpush1.bf16.msra.mxu0 %v127
    %151 = vmatprep.subr.bf16.mxu0 0
    %152 = vmatpush1.bf16.msra.mxu0 %v128
    %153 = vmatprep.subr.bf16.mxu0 0
    %154 = vmatpush1.bf16.msra.mxu0 0
    %155 = vmatprep.subr.bf16.mxu0 0
    %156 = vmatpush1.bf16.msra.mxu0 0
    %157 = vmatprep.subr.bf16.mxu0 0
    %158 = vmatpush1.bf16.msra.mxu0 0
    %159 = vmatprep.subr.bf16.mxu0 0
    %160 = vmatpush1.bf16.msra.mxu0 0
    %161 = vmatprep.subr.bf16.mxu0 0
    %162 = vmatpush1.bf16.msra.mxu0 0
    %163 = vmatprep.subr.bf16.mxu0 0
    %164 = vmatpush1.bf16.msra.mxu0 0
    %165 = vmatprep.subr.bf16.mxu0 0
    %166 = vmatpush1.bf16.msra.mxu0 0
    %167 = vmatprep.subr.bf16.mxu0 0
    %168 = vmatpush1.bf16.msra.mxu0 0
    %169 = vmatprep.mubr.bf16.mxu0 0
    %170 = vmatmul.mubr.bf16.gmra.mrb[0].mxu0 %v77
    %v171 = vpop.f32.mrb[0].mxu0
    %v172 = vadd.f32 0.0, %v171
    %v173 = vpop.f32.mrb[0].mxu0
    %v174 = vpop.f32.mrb[0].mxu0
    %v175 = vadd.f32 0.0, %v174
    %v176 = vpop.f32.mrb[0].mxu0
    %177 = vmatprep.mubr.bf16.mxu0 0
    %178 = vmatmul.mubr.bf16.gmra.mrb[0].mxu0 %v78
    %v179 = vpop.f32.mrb[0].mxu0
    %v180 = vadd.f32 0.0, %v179
    %v181 = vpop.f32.mrb[0].mxu0
    %v182 = vpop.f32.mrb[0].mxu0
    %v183 = vadd.f32 0.0, %v182
    %v184 = vpop.f32.mrb[0].mxu0
    %185 = vdwg.mxu0
    %186 = vmatprep.subr.bf16.mxu0 0
    %187 = vmatpush1.bf16.msra.mxu0 %v121
    %188 = vmatprep.subr.bf16.mxu0 0
    %189 = vmatpush1.bf16.msra.mxu0 %v122
    %190 = vmatprep.subr.bf16.mxu0 0
    %191 = vmatpush1.bf16.msra.mxu0 %v123
    %192 = vmatprep.subr.bf16.mxu0 0
    %193 = vmatpush1.bf16.msra.mxu0 %v124
    %194 = vmatprep.subr.bf16.mxu0 0
    %195 = vmatpush1.bf16.msra.mxu0 %v125
    %196 = vmatprep.subr.bf16.mxu0 0
    %197 = vmatpush1.bf16.msra.mxu0 %v126
    %198 = vmatprep.subr.bf16.mxu0 0
    %199 = vmatpush1.bf16.msra.mxu0 %v127
    %200 = vmatprep.subr.bf16.mxu0 0
    %201 = vmatpush1.bf16.msra.mxu0 %v128
    %202 = vmatprep.subr.bf16.mxu0 0
    %203 = vmatpush1.bf16.msra.mxu0 0
    %204 = vmatprep.subr.bf16.mxu0 0
    %205 = vmatpush1.bf16.msra.mxu0 0
    %206 = vmatprep.subr.bf16.mxu0 0
    %207 = vmatpush1.bf16.msra.mxu0 0
    %208 = vmatprep.subr.bf16.mxu0 0
    %209 = vmatpush1.bf16.msra.mxu0 0
    %210 = vmatprep.subr.bf16.mxu0 0
    %211 = vmatpush1.bf16.msra.mxu0 0
    %212 = vmatprep.subr.bf16.mxu0 0
    %213 = vmatpush1.bf16.msra.mxu0 0
    %214 = vmatprep.subr.bf16.mxu0 0
    %215 = vmatpush1.bf16.msra.mxu0 0
    %216 = vmatprep.subr.bf16.mxu0 0
    %217 = vmatpush1.bf16.msra.mxu0 0
    %218 = vmatprep.mubr.bf16.mxu0 0
    %219 = vmatmul.mubr.bf16.gmra.mrb[0].mxu0 %v67
    %v220 = vpop.f32.mrb[0].mxu0
    %v221 = vadd.f32 %v172, %v220
    %v222 = vpop.f32.mrb[0].mxu0
    %v223 = vpop.f32.mrb[0].mxu0
    %v224 = vadd.f32 %v175, %v223
    %v225 = vpop.f32.mrb[0].mxu0
    %226 = vmatprep.mubr.bf16.mxu0 0
    %227 = vmatmul.mubr.bf16.gmra.mrb[0].mxu0 %v68
    %v228 = vpop.f32.mrb[0].mxu0
    %v229 = vadd.f32 %v180, %v228
    %v230 = vpop.f32.mrb[0].mxu0
    %v231 = vpop.f32.mrb[0].mxu0
    %v232 = vadd.f32 %v183, %v231
    %v233 = vpop.f32.mrb[0].mxu0
    %234 = vdwg.mxu0
    %235 = vmatprep.subr.bf16.mxu0 0
    %236 = vmatpush1.bf16.msra.mxu0 %v121
    %237 = vmatprep.subr.bf16.mxu0 0
    %238 = vmatpush1.bf16.msra.mxu0 %v122
    %239 = vmatprep.subr.bf16.mxu0 0
    %240 = vmatpush1.bf16.msra.mxu0 %v123
    %241 = vmatprep.subr.bf16.mxu0 0
    %242 = vmatpush1.bf16.msra.mxu0 %v124
    %243 = vmatprep.subr.bf16.mxu0 0
    %244 = vmatpush1.bf16.msra.mxu0 %v125
    %245 = vmatprep.subr.bf16.mxu0 0
    %246 = vmatpush1.bf16.msra.mxu0 %v126
    %247 = vmatprep.subr.bf16.mxu0 0
    %248 = vmatpush1.bf16.msra.mxu0 %v127
    %249 = vmatprep.subr.bf16.mxu0 0
    %250 = vmatpush1.bf16.msra.mxu0 %v128
    %251 = vmatprep.subr.bf16.mxu0 0
    %252 = vmatpush1.bf16.msra.mxu0 0
    %253 = vmatprep.subr.bf16.mxu0 0
    %254 = vmatpush1.bf16.msra.mxu0 0
    %255 = vmatprep.subr.bf16.mxu0 0
    %256 = vmatpush1.bf16.msra.mxu0 0
    %257 = vmatprep.subr.bf16.mxu0 0
    %258 = vmatpush1.bf16.msra.mxu0 0
    %259 = vmatprep.subr.bf16.mxu0 0
    %260 = vmatpush1.bf16.msra.mxu0 0
    %261 = vmatprep.subr.bf16.mxu0 0
    %262 = vmatpush1.bf16.msra.mxu0 0
    %263 = vmatprep.subr.bf16.mxu0 0
    %264 = vmatpush1.bf16.msra.mxu0 0
    %265 = vmatprep.subr.bf16.mxu0 0
    %266 = vmatpush1.bf16.msra.mxu0 0
    %267 = vmatprep.mubr.bf16.mxu0 0
    %268 = vmatmul.mubr.bf16.gmra.mrb[0].mxu0 %v87
    %v269 = vpop.f32.mrb[0].mxu0
    %v270 = vadd.f32 0.0, %v269
    %v271 = vpop.f32.mrb[0].mxu0
    %v272 = vpop.f32.mrb[0].mxu0
    %v273 = vadd.f32 0.0, %v272
    %v274 = vpop.f32.mrb[0].mxu0
    %275 = vmatprep.mubr.bf16.mxu0 0
    %276 = vmatmul.mubr.bf16.gmra.mrb[0].mxu0 %v88
    %v277 = vpop.f32.mrb[0].mxu0
    %v278 = vadd.f32 0.0, %v277
    %v279 = vpop.f32.mrb[0].mxu0
    %v280 = vpop.f32.mrb[0].mxu0
    %v281 = vadd.f32 0.0, %v280
    %v282 = vpop.f32.mrb[0].mxu0
    %283 = vdwg.mxu0
    %v284 = vadd.f32 %v221, %v270
    %v285 = vadd.f32 %v224, %v273
    %v286 = vadd.f32 %v229, %v278
    %v287 = vadd.f32 %v232, %v281
    %v288 = vsub.f32 %v47, %v284
    %v289 = vsub.f32 %v48, %v285
    %v290 = vsub.f32 %v49, %v286
    %v291 = vsub.f32 %v50, %v287
    %v292 = vmul.f32 %v288, %v288
    %v293 = vmul.f32 %v289, %v289
    %v294 = vmul.f32 %v290, %v290
    %v295 = vmul.f32 %v291, %v291
    %v296 = vpack.c.bf16 %v293, %v292
    %v297 = vpack.c.bf16 %v295, %v294
    %v298 = vunpack.c.l.bf16 %v296
    %v299 = vunpack.c.h.bf16 %v296
    %v300 = vunpack.c.l.bf16 %v297
    %v301 = vunpack.c.h.bf16 %v297
    %v302 = vsub.f32 %v292, %v298
    %v303 = vsub.f32 %v293, %v299
    %v304 = vsub.f32 %v294, %v300
    %v305 = vsub.f32 %v295, %v301
    %v306 = vpack.c.bf16 %v303, %v302
    %v307 = vpack.c.bf16 %v305, %v304
    %v308 = vunpack.c.l.bf16 %v306
    %v309 = vunpack.c.h.bf16 %v306
    %v310 = vunpack.c.l.bf16 %v307
    %v311 = vunpack.c.h.bf16 %v307
    %v312 = vsub.f32 %v302, %v308
    %v313 = vsub.f32 %v303, %v309
    %v314 = vsub.f32 %v304, %v310
    %v315 = vsub.f32 %v305, %v311
    %v316 = vpack.c.bf16 %v313, %v312
    %v317 = vpack.c.bf16 %v315, %v314
    %318 = vmatprep.subr.bf16.mxu0 0
    %319 = vmatpush1.bf16.msra.mxu0 %v121
    %320 = vmatprep.subr.bf16.mxu0 0
    %321 = vmatpush1.bf16.msra.mxu0 %v122
    %322 = vmatprep.subr.bf16.mxu0 0
    %323 = vmatpush1.bf16.msra.mxu0 %v123
    %324 = vmatprep.subr.bf16.mxu0 0
    %325 = vmatpush1.bf16.msra.mxu0 %v124
    %326 = vmatprep.subr.bf16.mxu0 0
    %327 = vmatpush1.bf16.msra.mxu0 %v125
    %328 = vmatprep.subr.bf16.mxu0 0
    %329 = vmatpush1.bf16.msra.mxu0 %v126
    %330 = vmatprep.subr.bf16.mxu0 0
    %331 = vmatpush1.bf16.msra.mxu0 %v127
    %332 = vmatprep.subr.bf16.mxu0 0
    %333 = vmatpush1.bf16.msra.mxu0 %v128
    %334 = vmatprep.subr.bf16.mxu0 0
    %335 = vmatpush1.bf16.msra.mxu0 0
    %336 = vmatprep.subr.bf16.mxu0 0
    %337 = vmatpush1.bf16.msra.mxu0 0
    %338 = vmatprep.subr.bf16.mxu0 0
    %339 = vmatpush1.bf16.msra.mxu0 0
    %340 = vmatprep.subr.bf16.mxu0 0
    %341 = vmatpush1.bf16.msra.mxu0 0
    %342 = vmatprep.subr.bf16.mxu0 0
    %343 = vmatpush1.bf16.msra.mxu0 0
    %344 = vmatprep.subr.bf16.mxu0 0
    %345 = vmatpush1.bf16.msra.mxu0 0
    %346 = vmatprep.subr.bf16.mxu0 0
    %347 = vmatpush1.bf16.msra.mxu0 0
    %348 = vmatprep.subr.bf16.mxu0 0
    %349 = vmatpush1.bf16.msra.mxu0 0
    %350 = vmatprep.mubr.bf16.mxu0 0
    %351 = vmatmul.mubr.bf16.gmra.mrb[0].mxu0 %v306
    %v352 = vpop.f32.mrb[0].mxu0
    %v353 = vadd.f32 0.0, %v352
    %v354 = vpop.f32.mrb[0].mxu0
    %v355 = vpop.f32.mrb[0].mxu0
    %v356 = vadd.f32 0.0, %v355
    %v357 = vpop.f32.mrb[0].mxu0
    %358 = vmatprep.mubr.bf16.mxu0 0
    %359 = vmatmul.mubr.bf16.gmra.mrb[0].mxu0 %v307
    %v360 = vpop.f32.mrb[0].mxu0
    %v361 = vadd.f32 0.0, %v360
    %v362 = vpop.f32.mrb[0].mxu0
    %v363 = vpop.f32.mrb[0].mxu0
    %v364 = vadd.f32 0.0, %v363
    %v365 = vpop.f32.mrb[0].mxu0
    %366 = vdwg.mxu0
    %367 = vmatprep.subr.bf16.mxu0 0
    %368 = vmatpush1.bf16.msra.mxu0 %v121
    %369 = vmatprep.subr.bf16.mxu0 0
    %370 = vmatpush1.bf16.msra.mxu0 %v122
    %371 = vmatprep.subr.bf16.mxu0 0
    %372 = vmatpush1.bf16.msra.mxu0 %v123
    %373 = vmatprep.subr.bf16.mxu0 0
    %374 = vmatpush1.bf16.msra.mxu0 %v124
    %375 = vmatprep.subr.bf16.mxu0 0
    %376 = vmatpush1.bf16.msra.mxu0 %v125
    %377 = vmatprep.subr.bf16.mxu0 0
    %378 = vmatpush1.bf16.msra.mxu0 %v126
    %379 = vmatprep.subr.bf16.mxu0 0
    %380 = vmatpush1.bf16.msra.mxu0 %v127
    %381 = vmatprep.subr.bf16.mxu0 0
    %382 = vmatpush1.bf16.msra.mxu0 %v128
    %383 = vmatprep.subr.bf16.mxu0 0
    %384 = vmatpush1.bf16.msra.mxu0 0
    %385 = vmatprep.subr.bf16.mxu0 0
    %386 = vmatpush1.bf16.msra.mxu0 0
    %387 = vmatprep.subr.bf16.mxu0 0
    %388 = vmatpush1.bf16.msra.mxu0 0
    %389 = vmatprep.subr.bf16.mxu0 0
    %390 = vmatpush1.bf16.msra.mxu0 0
    %391 = vmatprep.subr.bf16.mxu0 0
    %392 = vmatpush1.bf16.msra.mxu0 0
    %393 = vmatprep.subr.bf16.mxu0 0
    %394 = vmatpush1.bf16.msra.mxu0 0
    %395 = vmatprep.subr.bf16.mxu0 0
    %396 = vmatpush1.bf16.msra.mxu0 0
    %397 = vmatprep.subr.bf16.mxu0 0
    %398 = vmatpush1.bf16.msra.mxu0 0
    %399 = vmatprep.mubr.bf16.mxu0 0
    %400 = vmatmul.mubr.bf16.gmra.mrb[0].mxu0 %v296
    %v401 = vpop.f32.mrb[0].mxu0
    %v402 = vadd.f32 %v353, %v401
    %v403 = vpop.f32.mrb[0].mxu0
    %v404 = vpop.f32.mrb[0].mxu0
    %v405 = vadd.f32 %v356, %v404
    %v406 = vpop.f32.mrb[0].mxu0
    %407 = vmatprep.mubr.bf16.mxu0 0
    %408 = vmatmul.mubr.bf16.gmra.mrb[0].mxu0 %v297
    %v409 = vpop.f32.mrb[0].mxu0
    %v410 = vadd.f32 %v361, %v409
    %v411 = vpop.f32.mrb[0].mxu0
    %v412 = vpop.f32.mrb[0].mxu0
    %v413 = vadd.f32 %v364, %v412
    %v414 = vpop.f32.mrb[0].mxu0
    %415 = vdwg.mxu0
    %416 = vmatprep.subr.bf16.mxu0 0
    %417 = vmatpush1.bf16.msra.mxu0 %v121
    %418 = vmatprep.subr.bf16.mxu0 0
    %419 = vmatpush1.bf16.msra.mxu0 %v122
    %420 = vmatprep.subr.bf16.mxu0 0
    %421 = vmatpush1.bf16.msra.mxu0 %v123
    %422 = vmatprep.subr.bf16.mxu0 0
    %423 = vmatpush1.bf16.msra.mxu0 %v124
    %424 = vmatprep.subr.bf16.mxu0 0
    %425 = vmatpush1.bf16.msra.mxu0 %v125
    %426 = vmatprep.subr.bf16.mxu0 0
    %427 = vmatpush1.bf16.msra.mxu0 %v126
    %428 = vmatprep.subr.bf16.mxu0 0
    %429 = vmatpush1.bf16.msra.mxu0 %v127
    %430 = vmatprep.subr.bf16.mxu0 0
    %431 = vmatpush1.bf16.msra.mxu0 %v128
    %432 = vmatprep.subr.bf16.mxu0 0
    %433 = vmatpush1.bf16.msra.mxu0 0
    %434 = vmatprep.subr.bf16.mxu0 0
    %435 = vmatpush1.bf16.msra.mxu0 0
    %436 = vmatprep.subr.bf16.mxu0 0
    %437 = vmatpush1.bf16.msra.mxu0 0
    %438 = vmatprep.subr.bf16.mxu0 0
    %439 = vmatpush1.bf16.msra.mxu0 0
    %440 = vmatprep.subr.bf16.mxu0 0
    %441 = vmatpush1.bf16.msra.mxu0 0
    %442 = vmatprep.subr.bf16.mxu0 0
    %443 = vmatpush1.bf16.msra.mxu0 0
    %444 = vmatprep.subr.bf16.mxu0 0
    %445 = vmatpush1.bf16.msra.mxu0 0
    %446 = vmatprep.subr.bf16.mxu0 0
    %447 = vmatpush1.bf16.msra.mxu0 0
    %448 = vmatprep.mubr.bf16.mxu0 0
    %449 = vmatmul.mubr.bf16.gmra.mrb[0].mxu0 %v316
    %v450 = vpop.f32.mrb[0].mxu0
    %v451 = vadd.f32 0.0, %v450
    %v452 = vpop.f32.mrb[0].mxu0
    %v453 = vpop.f32.mrb[0].mxu0
    %v454 = vadd.f32 0.0, %v453
    %v455 = vpop.f32.mrb[0].mxu0
    %456 = vmatprep.mubr.bf16.mxu0 0
    %457 = vmatmul.mubr.bf16.gmra.mrb[0].mxu0 %v317
    %v458 = vpop.f32.mrb[0].mxu0
    %v459 = vadd.f32 0.0, %v458
    %v460 = vpop.f32.mrb[0].mxu0
    %v461 = vpop.f32.mrb[0].mxu0
    %v462 = vadd.f32 0.0, %v461
    %v463 = vpop.f32.mrb[0].mxu0
    %464 = vdwg.mxu0
    %v465 = vadd.f32 %v402, %v451
    %v466 = vadd.f32 %v405, %v454
    %v467 = vadd.f32 %v410, %v459
    %v468 = vadd.f32 %v413, %v462
    %v469 = vadd.f32 %v465, 1e-05
    %v470 = vadd.f32 %v466, 1e-05
    %v471 = vadd.f32 %v467, 1e-05
    %v472 = vadd.f32 %v468, 1e-05
    %v473 = vrsqrt.pop %v469
    %v474 = vrsqrt.pop %v470
    %v475 = vrsqrt.pop %v471
    %v476 = vrsqrt.pop %v472
    %v477 = vld [vmem:[%s1] sm:$0x1]
    %v478 = vld [vmem:[%s2] sm:$0x1]
    %v479 = vmul.f32 %v288, %v473
    %v480 = vmul.f32 %v289, %v474
    %v481 = vmul.f32 %v290, %v475
    %v482 = vmul.f32 %v291, %v476
    %v484 = vlaneseq
    %v485 = vshrl.u32 %v484, 7
    %v486 = vsub.s32 0, %v485
    %v487 = vrot.slane %v477, %v486
    %v489 = vmul.f32 %v479, %v487
    %v490 = vmul.f32 %v480, %v487
    %v491 = vmul.f32 %v481, %v487
    %v492 = vmul.f32 %v482, %v487
    %v494 = vlaneseq
    %v495 = vshrl.u32 %v494, 7
    %v496 = vsub.s32 0, %v495
    %v497 = vrot.slane %v478, %v496
    %v499 = vadd.f32 %v489, %v497
    %v500 = vadd.f32 %v490, %v497
    %v501 = vadd.f32 %v491, %v497
    %v502 = vadd.f32 %v492, %v497
    %503 = vst [vmem:[#allocation7] sm:$0xff] %v499
    %504 = vst [vmem:[#allocation7 + $0x8] sm:$0xff] %v500
    %505 = vst [vmem:[#allocation7 + $0x10] sm:$0xff] %v501
    %506 = vst [vmem:[#allocation7 + $0x18] sm:$0xff] %v502
    // Predicated region
    $region26: #{tpu_custom_call.1} parent=1 // pred_check
      _
    $region27: #{tpu_custom_call.1} parent=1 // pred_check_branch
      %508 = sbr.rel (0) target = $region29
    $region28: #{tpu_custom_call.1} parent=1 // pred_region
      %s510 = ssub.s32 512, 512
      %511 = vsyncadd [#allocation4], %s510
      %s512 = sshll.u32 [#allocation7], 4
      %s513 = int_to_ptr.vmem [resolvable:$true] %s512
      %518 = dma.vmem_to_hbm [thread:$0]  %s513, 512, %s4, [#allocation4], 128, 128, 8
    $region29: #{tpu_custom_call.1} parent=1 // pred_fallthru
      _
    // Predicated region
    $region30: #{tpu_custom_call.1} parent=1 // pred_check
      _
    $region31: #{tpu_custom_call.1} parent=1 // pred_check_branch
      %520 = sbr.rel (0) target = $region33
    $region32: #{tpu_custom_call.1} parent=1 // pred_region
      %521 = dma.done [#allocation4], 512
    $region33: #{tpu_custom_call.1} parent=1 // pred_fallthru
      _
    %522 = vsyncpa [#allocation3], 1
    %523 = vsyncpa [#allocation6], 1
    %524 = vsyncpa [#allocation4], 1

</llo_original>
